<compile_context>
chip_gen: v6e
topology: v6e:2x2x1
jax: 0.10.0
libtpu: 0.0.40
codegen_flags: <defaults>
</compile_context>

<pallas_src>
import functools

import jax
import jax.numpy as jnp
from jax.experimental import pallas as pl
from jax.experimental.pallas import tpu as pltpu

KH, KW = 3, 3
C_IN, C_OUT = 3, 16
K_FUSED = KH * KW * C_IN  # 27


def _round_up(x, m):
    return ((x + m - 1) // m) * m


def _pick_images_per_block(n, hwp, max_lanes=32768):
    """Largest divisor of n whose block fits the lane budget.

    Prefers >=2 grid steps (ideally an even count) so the "parallel" grid axis
    can feed both TensorCores on v7x; no-op on v5e/v6e.
    """
    candidates = [d for d in range(1, n + 1) if n % d == 0 and d * hwp <= max_lanes]
    if not candidates:
        # TODO(synk): single images with H*W beyond the lane budget would need
        # intra-image lane tiling with a 2-row halo; not needed for this module.
        return 1
    multi = [d for d in candidates if n // d >= 2]
    if multi:
        even = [d for d in multi if (n // d) % 2 == 0]
        return max(even) if even else max(multi)
    return max(candidates)


def _conv_fused_kernel(w_ref, b_ref, x_ref, o_ref, *, img_w, m_blk):
    # w_ref: (C_OUT, 27) f32   -- column (kh*KW + kw)*C_IN + c  (VMEM-resident)
    # b_ref: (C_OUT, 1)  f32   -- test_flag already folded in
    # x_ref: (C_IN, m_blk) bf16 -- block of flattened, 128-padded image stripes
    # o_ref: (C_OUT, m_blk) f32 -- same stripe layout, M on lanes (wide stores)
    x = x_ref[...].astype(jnp.float32)  # (C_IN, m_blk)

    rows = []
    for t in range(KH * KW):
        kh, kw = divmod(t, KW)
        s = kh * img_w + kw
        if s == 0:
            rows.append(x)
        else:
            # rolled[:, i] == x[:, (i + s) % m_blk]  (== jnp.roll(x, -s, axis=1)).
            # Wraparound / cross-stripe lanes only ever feed conv border
            # positions that the wrapper crops.
            rows.append(pltpu.roll(x, m_blk - s, axis=1))
    op = jnp.concatenate(rows, axis=0)  # (27, m_blk) f32

    # One fused K=27 GEMM; output written exactly once (no accumulator RMW,
    # no zero tail store).
    o_ref[...] = (
        jnp.dot(w_ref[...], op, preferred_element_type=jnp.float32) + b_ref[...]
    )


@functools.partial(jax.jit, static_argnames="test_flag")
def model_with_flag_forward(x_nchw, weight, bias, test_flag=False):
    """Reproduces ModelWithFlag.forward. x_nchw: (N, 3, H, W) float32."""
    n, c, h, w = x_nchw.shape
    assert c == C_IN and weight.shape == (C_OUT, C_IN, KH, KW)
    ho, wo = h - KH + 1, w - KW + 1
    hw = h * w

    # Fold the test_flag branch exactly: conv(x + 1) = conv(x) + sum(W) per
    # output channel (computed in f32, no extra pass over x).
    bias_eff = bias.astype(jnp.float32)
    if test_flag:
        bias_eff = bias_eff + weight.astype(jnp.float32).sum(axis=(1, 2, 3))

    # Slack-free stripe layout: each image flattened to H*W lanes, padded only
    # to a multiple of 128 (zero padding for 16x16 images). For every KEPT
    # output pixel p (r < H-2, c < W-2) and tap shift s <= 2W+2 we have
    # p + s <= H*W - 1, so valid reads never leave the image's own stripe;
    # contaminated lanes only feed cropped border positions.
    hwp = _round_up(hw, 128)

    tb = _pick_images_per_block(n, hwp)  # images per grid step
    m_blk = tb * hwp
    grid = (n // tb,)

    # Single fused pass over x: NCHW -> (C, N, H*W) -> pad -> (C, N*hwp), bf16.
    x_prep = x_nchw.transpose(1, 0, 2, 3).reshape(C_IN, n, hw)
    if hwp != hw:
        x_prep = jnp.pad(x_prep, ((0, 0), (0, 0), (0, hwp - hw)))
    x_prep = x_prep.reshape(C_IN, n * hwp).astype(jnp.bfloat16)

    # Weights: (C_OUT, C_IN, KH, KW) -> (C_OUT, KH, KW, C_IN) -> (C_OUT, 27),
    # matching operand row order t*C_IN + c. Kept f32 (tiny, exact).
    w27 = weight.transpose(0, 2, 3, 1).reshape(C_OUT, K_FUSED).astype(jnp.float32)
    b_col = bias_eff.reshape(C_OUT, 1)

    kernel = functools.partial(_conv_fused_kernel, img_w=w, m_blk=m_blk)

    out_flat = pl.pallas_call(
        kernel,
        out_shape=jax.ShapeDtypeStruct((C_OUT, n * hwp), jnp.float32),
        grid=grid,
        in_specs=[
            pl.BlockSpec((C_OUT, K_FUSED), lambda i: (0, 0)),  # VMEM-resident
            pl.BlockSpec((C_OUT, 1), lambda i: (0, 0)),
            pl.BlockSpec((C_IN, m_blk), lambda i: (0, i)),
        ],
        out_specs=pl.BlockSpec((C_OUT, m_blk), lambda i: (0, i)),
        compiler_params=pltpu.CompilerParams(
            dimension_semantics=("parallel",),
            vmem_limit_bytes=32 * 1024 * 1024,
        ),
    )(w27, b_col, x_prep)

    # Crop stripe round-up padding and the conv's right/bottom borders; the
    # cropped lanes may hold garbage (cross-stripe / wraparound taps) -- never
    # read out_flat directly.
    y = out_flat.reshape(C_OUT, n, hwp)[:, :, :hw]
    y = y.reshape(C_OUT, n, h, w)[:, :, :ho, :wo]
    return y.transpose(1, 0, 2, 3)


if __name__ == "__main__":
    key = jax.random.PRNGKey(0)
    kx, kw_, kb = jax.random.split(key, 3)

    # Small shapes consistent with the module's test input (1, 3, 16, 16).
    x = jax.random.normal(kx, (2, C_IN, 16, 16), jnp.float32)
    weight = 0.1 * jax.random.normal(kw_, (C_OUT, C_IN, KH, KW), jnp.float32)
    bias = 0.1 * jax.random.normal(kb, (C_OUT,), jnp.float32)

    y = jax.block_until_ready(
        model_with_flag_forward(x, weight, bias, test_flag=False))

    # Reference: XLA conv (NCHW, OIHW, VALID).
    def ref_conv(xin):
        return jax.lax.conv_general_dilated(
            xin, weight, window_strides=(1, 1), padding="VALID",
            dimension_numbers=("NCHW", "OIHW", "NCHW"),
        ) + bias.reshape(1, C_OUT, 1, 1)

    y_ref = ref_conv(x)
    assert y.shape == (2, C_OUT, 14, 14)
    assert jnp.allclose(y, y_ref, atol=5e-2, rtol=5e-2), float(
        jnp.max(jnp.abs(y - y_ref)))

    # test_flag=True path (conv(x + 1)), folded into the bias inside the wrapper.
    y_flag = jax.block_until_ready(
        model_with_flag_forward(x, weight, bias, test_flag=True))
    y_flag_ref = ref_conv(x + 1.0)
    assert jnp.allclose(y_flag, y_flag_ref, atol=5e-2, rtol=5e-2), float(
        jnp.max(jnp.abs(y_flag - y_flag_ref)))

    print("KERNEL_OK")
</pallas_src>

<mosaic_0001>
module attributes {stable_mosaic.version = 11 : i64} {
  func.func @_conv_fused_kernel(%arg0: i32, %arg1: memref<16x27xf32, #tpu.memory_space<vmem>>, %arg2: memref<16x1xf32, #tpu.memory_space<vmem>>, %arg3: memref<3x256xbf16, #tpu.memory_space<vmem>>, %arg4: memref<16x256xf32, #tpu.memory_space<vmem>>) attributes {dimension_semantics = [#tpu.dimension_semantics<parallel>], iteration_bounds = array<i64: 2>, scalar_prefetch = 0 : i64, scratch_operands = 0 : i64, tpu.core_type = #tpu.core_type<tc>, window_params = [{pipeline_mode = #tpu.pipeline_mode<synchronous>, transform_indices = @transform_0, window_bounds = array<i64: 16, 27>}, {pipeline_mode = #tpu.pipeline_mode<synchronous>, transform_indices = @transform_1, window_bounds = array<i64: 16, 1>}, {transform_indices = @transform_2, window_bounds = array<i64: 3, 256>}, {transform_indices = @transform_3, window_bounds = array<i64: 16, 256>}]} {
    %c0 = arith.constant 0 : index
    %c0_0 = arith.constant 0 : index
    %0 = vector.load %arg3[%c0, %c0_0] : memref<3x256xbf16, #tpu.memory_space<vmem>>, vector<3x256xbf16>
    %1 = arith.extf %0 : vector<3x256xbf16> to vector<3x256xf32>
    %c255_i32 = arith.constant 255 : i32
    %2 = tpu.dynamic_rotate %1 by %c255_i32 dim 1 : vector<3x256xf32>, i32 -> vector<3x256xf32>
    %c254_i32 = arith.constant 254 : i32
    %3 = tpu.dynamic_rotate %1 by %c254_i32 dim 1 : vector<3x256xf32>, i32 -> vector<3x256xf32>
    %c240_i32 = arith.constant 240 : i32
    %4 = tpu.dynamic_rotate %1 by %c240_i32 dim 1 : vector<3x256xf32>, i32 -> vector<3x256xf32>
    %c239_i32 = arith.constant 239 : i32
    %5 = tpu.dynamic_rotate %1 by %c239_i32 dim 1 : vector<3x256xf32>, i32 -> vector<3x256xf32>
    %c238_i32 = arith.constant 238 : i32
    %6 = tpu.dynamic_rotate %1 by %c238_i32 dim 1 : vector<3x256xf32>, i32 -> vector<3x256xf32>
    %c224_i32 = arith.constant 224 : i32
    %7 = tpu.dynamic_rotate %1 by %c224_i32 dim 1 : vector<3x256xf32>, i32 -> vector<3x256xf32>
    %c223_i32 = arith.constant 223 : i32
    %8 = tpu.dynamic_rotate %1 by %c223_i32 dim 1 : vector<3x256xf32>, i32 -> vector<3x256xf32>
    %c222_i32 = arith.constant 222 : i32
    %9 = tpu.dynamic_rotate %1 by %c222_i32 dim 1 : vector<3x256xf32>, i32 -> vector<3x256xf32>
    %10 = tpu.concatenate %1, %2, %3, %4, %5, %6, %7, %8, %9 in 0 : vector<3x256xf32>, vector<3x256xf32>, vector<3x256xf32>, vector<3x256xf32>, vector<3x256xf32>, vector<3x256xf32>, vector<3x256xf32>, vector<3x256xf32>, vector<3x256xf32> -> vector<27x256xf32>
    %c0_1 = arith.constant 0 : index
    %c0_2 = arith.constant 0 : index
    %11 = vector.load %arg1[%c0_1, %c0_2] : memref<16x27xf32, #tpu.memory_space<vmem>>, vector<16x27xf32>
    %cst = arith.constant dense<0.000000e+00> : vector<16x256xf32>
    %12 = tpu.matmul %11, %10, %cst {dimension_numbers = #tpu.dot_dimension_numbers<[1], [0], [0], [1], [0, 0, 1, 1], [], []>} : vector<16x27xf32>, vector<27x256xf32>, vector<16x256xf32> -> vector<16x256xf32>
    %c0_3 = arith.constant 0 : index
    %c0_4 = arith.constant 0 : index
    %13 = vector.load %arg2[%c0_3, %c0_4] : memref<16x1xf32, #tpu.memory_space<vmem>>, vector<16x1xf32>
    %14 = vector.broadcast %13 : vector<16x1xf32> to vector<16x256xf32>
    %15 = arith.addf %12, %14 : vector<16x256xf32>
    %c0_5 = arith.constant 0 : index
    %c0_6 = arith.constant 0 : index
    %16 = vector.load %arg4[%c0_5, %c0_6] : memref<16x256xf32, #tpu.memory_space<vmem>>, vector<16x256xf32>
    tpu.vector_store %arg4[%c0_5, %c0_6], %15 {strides = array<i32>} : memref<16x256xf32, #tpu.memory_space<vmem>>, vector<16x256xf32>,
    return
  }
  func.func @transform_0(%arg0: i32) -> (i32, i32) {
    %c0_i32 = arith.constant 0 : i32
    %c0_i32_0 = arith.constant 0 : i32
    %c0_i32_1 = arith.constant 0 : i32
    return %c0_i32, %c0_i32_0 : i32, i32
  }
  func.func @transform_1(%arg0: i32) -> (i32, i32) {
    %c0_i32 = arith.constant 0 : i32
    %c0_i32_0 = arith.constant 0 : i32
    %c0_i32_1 = arith.constant 0 : i32
    return %c0_i32, %c0_i32_0 : i32, i32
  }
  func.func @transform_2(%arg0: i32) -> (i32, i32) {
    %c0_i32 = arith.constant 0 : i32
    %c0_i32_0 = arith.constant 0 : i32
    return %c0_i32, %arg0 : i32, i32
  }
  func.func @transform_3(%arg0: i32) -> (i32, i32) {
    %c0_i32 = arith.constant 0 : i32
    %c0_i32_0 = arith.constant 0 : i32
    return %c0_i32, %arg0 : i32, i32
  }
}

</mosaic_0001>

<llo_original>
// kernel: model_with_flag_forward.1
$region0: #{model_with_flag_forward.1}
  #allocation0 [shape = 'u32[]', space=smem, size = 0x4, offset = 0x4, fixed_abs, tag = 'smem constant byte address 0x4 - core index']
  #allocation1 [shape = 'u32[144,128]{1,0:T(1,128)}', space=vmem, size = 0x12000, scoped, tag = 'internal scratch']
  %s0 = inlined_call_operand.vmem [shape: f32[16,27], index: 0, kind: input, shape index: {}]
  %s1 = inlined_call_operand.vmem [shape: f32[16,1], index: 1, kind: input, shape index: {}]
  %s2 = inlined_call_operand.vmem [shape: bf16[3,512], index: 2, kind: input, shape index: {}]
  %s3 = inlined_call_operand.vmem [shape: f32[16,512], index: 3, kind: output, shape index: {}]
  %s4 = sld [smem:[#allocation0]]
  $region64: #{model_with_flag_forward.1} parent=0
    _
  %s6 = ssub.s32 1, %s4
  %s7 = scalar_select 0, %s6, %s4
  $region1: #{model_with_flag_forward.1} parent=0
    #allocation2 [shape = 'u8[32768]{0}', space=vmem, size = 0x8000, scoped, tag = 'output window, operand 0']
    loop: start=0, step=1, limit=4
    $region2: #{model_with_flag_forward.1} parent=1 // loop_pre_header
      _
    $region3: #{model_with_flag_forward.1} parent=1 // loop_header
      %s9 = sphi 0, %s13
      %p10 = scmp.ge.s32.totalorder %s9, 4
      %s17 = sphi 0, %s17
      %s19 = sphi 0, %s17
      %s20 = sphi 0, %s19
      %s34 = sphi 0, %s20
      %s38 = sphi 0, %s38
      %s40 = sphi 0, %s38
      %s41 = sphi 0, %s40
      %s55 = sphi 0, %s41
      %s61 = sphi 0, %s63
      %s64 = sphi 0, %s61
      %s65 = sphi 0, %s64
      %s81 = sphi 0, %s65
      %s87 = sphi 0, %s89
      %s90 = sphi 0, %s87
      %s91 = sphi 0, %s90
      %s107 = sphi 0, %s91
    $region4: #{model_with_flag_forward.1} parent=1 // loop_header_branch
      %12 = sbr.rel (%p10) target = $region8
    $region5: #{model_with_flag_forward.1} parent=1 // loop_body
      %s14 = ssub.s32 %s9, 1
      %s15 = ssub.s32 %s9, 2
      %s16 = sadd.s32 %s9, 1
      %s18 = sadd.s32 %s17, 1
      %p21 = scmp.eq.s32.totalorder %s9, 1
      %p22 = scmp.ne.s32.totalorder %s17, %s19
      %p23 = scmp.eq.s32.totalorder %s9, 0
      %p24 = por %p22, %p23
      %p25 = scmp.ne.s32.totalorder %s17, %s19
      %p26 = scmp.eq.s32.totalorder %s14, 1
      %p27 = por %p25, %p26
      %p28 = scmp.ne.s32.totalorder %s19, %s20
      %p29 = scmp.eq.s32.totalorder %s14, 0
      %p30 = por %p28, %p29
      %p31 = scmp.ne.s32.totalorder %s19, %s20
      %p32 = scmp.eq.s32.totalorder %s15, 1
      %p33 = por %p31, %p32
      %p35 = scmp.ne.s32.totalorder %s20, %s34
      %p36 = scmp.eq.s32.totalorder %s15, 0
      %p37 = por %p35, %p36
      %s39 = sadd.s32 %s38, 1
      %p42 = scmp.eq.s32.totalorder %s9, 1
      %p43 = scmp.ne.s32.totalorder %s38, %s40
      %p44 = scmp.eq.s32.totalorder %s9, 0
      %p45 = por %p43, %p44
      %p46 = scmp.ne.s32.totalorder %s38, %s40
      %p47 = scmp.eq.s32.totalorder %s14, 1
      %p48 = por %p46, %p47
      %p49 = scmp.ne.s32.totalorder %s40, %s41
      %p50 = scmp.eq.s32.totalorder %s14, 0
      %p51 = por %p49, %p50
      %p52 = scmp.ne.s32.totalorder %s40, %s41
      %p53 = scmp.eq.s32.totalorder %s15, 1
      %p54 = por %p52, %p53
      %p56 = scmp.ne.s32.totalorder %s41, %s55
      %p57 = scmp.eq.s32.totalorder %s15, 0
      %p58 = por %p56, %p57
      %s59 = ssub.s32 %s9, %s16
      %p60 = scmp.eq.s32.totalorder %s59, 0
      %s62 = sadd.s32 %s61, 1
      %s63 = scalar_select %p60, %s61, %s62
      %p66 = pneg %p60
      %p67 = scmp.eq.s32.totalorder %s9, 1
      %p68 = por %p66, %p67
      %p69 = scmp.ne.s32.totalorder %s61, %s64
      %p70 = scmp.eq.s32.totalorder %s9, 0
      %p71 = por %p69, %p70
      %p72 = scmp.ne.s32.totalorder %s61, %s64
      %p73 = scmp.eq.s32.totalorder %s14, 1
      %p74 = por %p72, %p73
      %p75 = scmp.ne.s32.totalorder %s64, %s65
      %p76 = scmp.eq.s32.totalorder %s14, 0
      %p77 = por %p75, %p76
      %p78 = scmp.ne.s32.totalorder %s64, %s65
      %p79 = scmp.eq.s32.totalorder %s15, 1
      %p80 = por %p78, %p79
      %p82 = scmp.ne.s32.totalorder %s65, %s81
      %p83 = scmp.eq.s32.totalorder %s15, 0
      %p84 = por %p82, %p83
      %s85 = ssub.s32 %s9, %s16
      %p86 = scmp.eq.s32.totalorder %s85, 0
      %s88 = sadd.s32 %s87, 1
      %s89 = scalar_select %p86, %s87, %s88
      %p92 = pneg %p86
      %p93 = scmp.eq.s32.totalorder %s9, 1
      %p94 = por %p92, %p93
      %p95 = scmp.ne.s32.totalorder %s87, %s90
      %p96 = scmp.eq.s32.totalorder %s9, 0
      %p97 = por %p95, %p96
      %p98 = scmp.ne.s32.totalorder %s87, %s90
      %p99 = scmp.eq.s32.totalorder %s14, 1
      %p100 = por %p98, %p99
      %p101 = scmp.ne.s32.totalorder %s90, %s91
      %p102 = scmp.eq.s32.totalorder %s14, 0
      %p103 = por %p101, %p102
      %p104 = scmp.ne.s32.totalorder %s90, %s91
      %p105 = scmp.eq.s32.totalorder %s15, 1
      %p106 = por %p104, %p105
      %p108 = scmp.ne.s32.totalorder %s91, %s107
      %p109 = scmp.eq.s32.totalorder %s15, 0
      %p110 = por %p108, %p109
      %p111 = scmp.le.s32.totalorder 1, %s9
      %p112 = scmp.lt.s32.totalorder %s9, 3
      %p113 = pnand %p111, %p112
      %p114 = pneg %p113
      // Predicated region
      $region9: #{model_with_flag_forward.1} parent=5 // pred_check
        _
      $region10: #{model_with_flag_forward.1} parent=5 // pred_check_branch
        %116 = sbr.rel (%p113) target = $region12
      $region11: #{model_with_flag_forward.1} parent=5 // pred_region
        %s117 = ssub.s32 %s9, 1
        // Predicated region
        $region13: #{model_with_flag_forward.1} parent=11 // pred_check
          %p118 = pneg %p30
        $region14: #{model_with_flag_forward.1} parent=11 // pred_check_branch
          %120 = sbr.rel (%p118) target = $region16
        $region15: #{model_with_flag_forward.1} parent=11 // pred_region
          _
        $region16: #{model_with_flag_forward.1} parent=11 // pred_fallthru
          _
        // Predicated region
        $region17: #{model_with_flag_forward.1} parent=11 // pred_check
          %p121 = pneg %p51
        $region18: #{model_with_flag_forward.1} parent=11 // pred_check_branch
          %123 = sbr.rel (%p121) target = $region20
        $region19: #{model_with_flag_forward.1} parent=11 // pred_region
          _
        $region20: #{model_with_flag_forward.1} parent=11 // pred_fallthru
          _
      $region12: #{model_with_flag_forward.1} parent=5 // pred_fallthru
        _
      %p124 = scmp.lt.s32.totalorder %s9, 2
      // Predicated region
      $region21: #{model_with_flag_forward.1} parent=5 // pred_check
        %p125 = pneg %p124
      $region22: #{model_with_flag_forward.1} parent=5 // pred_check_branch
        %127 = sbr.rel (%p125) target = $region24
      $region23: #{model_with_flag_forward.1} parent=5 // pred_region
        // Predicated region
        $region25: #{model_with_flag_forward.1} parent=23 // pred_check
          %p128 = pneg %p71
        $region26: #{model_with_flag_forward.1} parent=23 // pred_check_branch
          %130 = sbr.rel (%p128) target = $region28
        $region27: #{model_with_flag_forward.1} parent=23 // pred_region
          %s131 = smul.u32 2, %s9
          %p132 = scmp.lt.s32.totalorder %s131, 3
          %s133 = scalar_select %p132, %s131, 3
          %s134 = smul.addr %s133, 2
          %s135 = scalar_lea.vmem %s2, %s134
          %s136 = smul.u32 2, %s9
        $region28: #{model_with_flag_forward.1} parent=23 // pred_fallthru
          _
      $region24: #{model_with_flag_forward.1} parent=5 // pred_fallthru
        _
      %p137 = scmp.le.s32.totalorder 1, %s9
      %p138 = scmp.lt.s32.totalorder %s9, 3
      %p139 = pnand %p137, %p138
      %p140 = pneg %p139
      // Predicated region
      $region29: #{model_with_flag_forward.1} parent=5 // pred_check
        _
      $region30: #{model_with_flag_forward.1} parent=5 // pred_check_branch
        %142 = sbr.rel (%p139) target = $region32
      $region31: #{model_with_flag_forward.1} parent=5 // pred_region
        %s143 = ssub.s32 %s9, 1
        %p144 = pneg %p30
        %p145 = pneg %p27
        %p146 = pneg %p51
        %p147 = pneg %p48
        %s148 = smul.u32 2, %s14
        %p149 = scmp.lt.s32.totalorder %s148, 3
        %s150 = scalar_select %p149, %s148, 3
        %s151 = smul.addr %s150, 2
        %s152 = scalar_lea.vmem %s2, %s151
        %p153 = pneg %p77
        %p154 = pneg %p74
        %p155 = pneg %p103
        %p156 = pneg %p100
        %s157 = sand.u32 %s90, 1
        %s158 = sand.u32 %s90, 1
        %s159 = smul.addr %s158, 32
        %s160 = scalar_lea.vmem [#allocation2], %s159
        %s161 = smul.u32 2, %s14
        %p162 = scmp.lt.s32.totalorder %s161, 3
        %s163 = scalar_select %p162, %s161, 3
        %s164 = smul.addr %s163, 2
        %s165 = scalar_lea.vmem %s2, %s164
        %s166 = smul.u32 2, %s14
        %s167 = smul.u32 2, %s14
        %v168 = vld [vmem:[%s165] sm:$0xf]
        %v169 = vunpack.c.l.bf16 %v168
        %v171 = vcombine.high %v169, %v169
        %173 = vrot.lane.b32.xlu0 %v169, 127
        %v174 = vpop.permute.xlu0 %173
        %175 = vrot.lane.b32.xlu0 %v171, 127
        %v176 = vpop.permute.xlu0 %175
        %v177 = vlaneseq
        %v178 = vand.u32 %v177, 127
        %vm179 = vcmp.lt.s32.totalorder %v178, 127
        %v180 = vsel %vm179, %v174, %v176
        %v181 = vsel %vm179, %v176, %v174
        %182 = vrot.lane.b32.xlu0 %v169, 126
        %v183 = vpop.permute.xlu0 %182
        %184 = vrot.lane.b32.xlu0 %v171, 126
        %v185 = vpop.permute.xlu0 %184
        %vm186 = vcmp.lt.s32.totalorder %v178, 126
        %v187 = vsel %vm186, %v183, %v185
        %v188 = vsel %vm186, %v185, %v183
        %189 = vrot.lane.b32.xlu0 %v169, 112
        %v190 = vpop.permute.xlu0 %189
        %191 = vrot.lane.b32.xlu0 %v171, 112
        %v192 = vpop.permute.xlu0 %191
        %vm193 = vcmp.lt.s32.totalorder %v178, 112
        %v194 = vsel %vm193, %v190, %v192
        %v195 = vsel %vm193, %v192, %v190
        %196 = vrot.lane.b32.xlu0 %v169, 111
        %v197 = vpop.permute.xlu0 %196
        %198 = vrot.lane.b32.xlu0 %v171, 111
        %v199 = vpop.permute.xlu0 %198
        %vm200 = vcmp.lt.s32.totalorder %v178, 111
        %v201 = vsel %vm200, %v197, %v199
        %v202 = vsel %vm200, %v199, %v197
        %203 = vrot.lane.b32.xlu0 %v169, 110
        %v204 = vpop.permute.xlu0 %203
        %205 = vrot.lane.b32.xlu0 %v171, 110
        %v206 = vpop.permute.xlu0 %205
        %vm207 = vcmp.lt.s32.totalorder %v178, 110
        %v208 = vsel %vm207, %v204, %v206
        %v209 = vsel %vm207, %v206, %v204
        %210 = vrot.lane.b32.xlu0 %v169, 96
        %v211 = vpop.permute.xlu0 %210
        %212 = vrot.lane.b32.xlu0 %v171, 96
        %v213 = vpop.permute.xlu0 %212
        %vm214 = vcmp.lt.s32.totalorder %v178, 96
        %v215 = vsel %vm214, %v211, %v213
        %v216 = vsel %vm214, %v213, %v211
        %217 = vrot.lane.b32.xlu0 %v169, 95
        %v218 = vpop.permute.xlu0 %217
        %219 = vrot.lane.b32.xlu0 %v171, 95
        %v220 = vpop.permute.xlu0 %219
        %vm221 = vcmp.lt.s32.totalorder %v178, 95
        %v222 = vsel %vm221, %v218, %v220
        %v223 = vsel %vm221, %v220, %v218
        %224 = vrot.lane.b32.xlu0 %v169, 94
        %v225 = vpop.permute.xlu0 %224
        %226 = vrot.lane.b32.xlu0 %v171, 94
        %v227 = vpop.permute.xlu0 %226
        %vm228 = vcmp.lt.s32.totalorder %v178, 94
        %v229 = vsel %vm228, %v225, %v227
        %v230 = vsel %vm228, %v227, %v225
        %v233 = vrot.slane %v180, 5
        %v234 = vrot.slane %v181, 5
        %v239 = vrot.slane %v187, 2
        %v240 = vrot.slane %v188, 2
        %v245 = vrot.slane %v194, 7
        %v246 = vrot.slane %v195, 7
        %v251 = vrot.slane %v201, 4
        %v252 = vrot.slane %v202, 4
        %v257 = vrot.slane %v208, 1
        %v258 = vrot.slane %v209, 1
        %v263 = vrot.slane %v215, 6
        %v264 = vrot.slane %v216, 6
        %v269 = vrot.slane %v222, 3
        %v270 = vrot.slane %v223, 3
        %vm273 = vcmask 1042432
        %v274 = vsel %vm273, %v169, %v233
        %v275 = vsel %vm273, %v171, %v234
        %vm276 = vcmask 1045504
        %v277 = vsel %vm276, %v274, %v239
        %v278 = vsel %vm276, %v275, %v240
        %vm279 = vcmask 1040384
        %v280 = vsel %vm279, %v239, %v245
        %v281 = vsel %vm279, %v240, %v246
        %vm282 = vcmask 1043456
        %v283 = vsel %vm282, %v280, %v251
        %v284 = vsel %vm282, %v281, %v252
        %vm285 = vcmask 1046528
        %v286 = vsel %vm285, %v283, %v257
        %v287 = vsel %vm285, %v284, %v258
        %vm288 = vcmask 1041408
        %v289 = vsel %vm288, %v257, %v263
        %v290 = vsel %vm288, %v258, %v264
        %vm291 = vcmask 1044480
        %v292 = vsel %vm291, %v289, %v269
        %v293 = vsel %vm291, %v290, %v270
        %v294 = vld [vmem:[%s0] sm:$0xff]
        %v295 = vld [vmem:[%s0 + $0x8] sm:$0xff]
        %v296 = vld [vmem:[%s1] sm:$0xff]
        %v297 = vld [vmem:[%s1 + $0x8] sm:$0xff]
        %299 = vset.pattern.permute.xlu0 0
        %300 = vperm.xlu0 %299, %v296
        %v301 = vpop.permute.xlu0 %300
        %304 = vset.pattern.permute.xlu0 0
        %305 = vperm.xlu0 %304, %v297
        %v306 = vpop.permute.xlu0 %305
        %vm308 = vcmask 220160
        %v310 = vsel %vm308, %v294, 0
        %v313 = vsel %vm308, %v295, 0
        %v316 = vsel %vm273, %v229, 0
        %v319 = vsel %vm273, %v230, 0
        %321 = vmatprep.subr.mxu0 0.0
        %322 = vmatpush1.msra.mxu0 0.0
        %323 = vmatprep.subr.mxu0 0.0
        %324 = vmatpush1.msra.mxu0 0.0
        %325 = vmatprep.subr.mxu0 0.0
        %326 = vmatpush1.msra.mxu0 0.0
        %327 = vmatprep.subr.mxu0 0.0
        %328 = vmatpush1.msra.mxu0 0.0
        %329 = vmatprep.subr.mxu0 0.0
        %330 = vmatpush1.msra.mxu0 0.0
        %331 = vmatprep.subr.mxu0 0.0
        %332 = vmatpush1.msra.mxu0 0.0
        %333 = vmatprep.subr.mxu0 0.0
        %334 = vmatpush1.msra.mxu0 0.0
        %335 = vmatprep.subr.mxu0 0.0
        %336 = vmatpush1.msra.mxu0 0.0
        %337 = vmatprep.subr.mxu0 0.0
        %338 = vmatpush1.msra.mxu0 0.0
        %339 = vmatprep.subr.mxu0 0.0
        %340 = vmatpush1.msra.mxu0 0.0
        %341 = vmatprep.subr.mxu0 0.0
        %342 = vmatpush1.msra.mxu0 0.0
        %343 = vmatprep.subr.mxu0 0.0
        %344 = vmatpush1.msra.mxu0 0.0
        %345 = vmatprep.subr.mxu0 %v319
        %346 = vmatpush1.msra.mxu0 %v316
        %347 = vmatprep.subr.mxu0 %v293
        %348 = vmatpush1.msra.mxu0 %v292
        %349 = vmatprep.subr.mxu0 %v287
        %350 = vmatpush1.msra.mxu0 %v286
        %351 = vmatprep.subr.mxu0 %v278
        %352 = vmatpush1.msra.mxu0 %v277
        %353 = vmatprep.subr.mxu0 0.0
        %354 = vmatpush2.msra.mxu0 0.0
        %355 = vmatprep.subr.mxu0 0.0
        %356 = vmatpush2.msra.mxu0 0.0
        %357 = vmatprep.subr.mxu0 0.0
        %358 = vmatpush2.msra.mxu0 0.0
        %359 = vmatprep.subr.mxu0 0.0
        %360 = vmatpush2.msra.mxu0 0.0
        %361 = vmatprep.subr.mxu0 0.0
        %362 = vmatpush2.msra.mxu0 0.0
        %363 = vmatprep.subr.mxu0 0.0
        %364 = vmatpush2.msra.mxu0 0.0
        %365 = vmatprep.subr.mxu0 0.0
        %366 = vmatpush2.msra.mxu0 0.0
        %367 = vmatprep.subr.mxu0 0.0
        %368 = vmatpush2.msra.mxu0 0.0
        %369 = vmatprep.subr.mxu0 0.0
        %370 = vmatpush2.msra.mxu0 0.0
        %371 = vmatprep.subr.mxu0 0.0
        %372 = vmatpush2.msra.mxu0 0.0
        %373 = vmatprep.subr.mxu0 0.0
        %374 = vmatpush2.msra.mxu0 0.0
        %375 = vmatprep.subr.mxu0 0.0
        %376 = vmatpush2.msra.mxu0 0.0
        %377 = vmatprep.subr.mxu0 0.0
        %378 = vmatpush2.msra.mxu0 0.0
        %379 = vmatprep.subr.mxu0 0.0
        %380 = vmatpush2.msra.mxu0 0.0
        %381 = vmatprep.subr.mxu0 0.0
        %382 = vmatpush2.msra.mxu0 0.0
        %383 = vmatprep.subr.mxu0 0.0
        %384 = vmatpush2.msra.mxu0 0.0
        %385 = vmatprep.mubr.f32.mxu0 0.0
        %386 = vmatmul.mubr.f32.gmra.mxu0 %v310
        %v387 = vpop.f32.mrf.mxu0
        %v388 = vadd.f32 %v301, %v387
        %v389 = vpop.f32.mrf.mxu0
        %v390 = vadd.f32 %v301, %v389
        %391 = vmatprep.mubr.f32.mxu0 0.0
        %392 = vmatmul.mubr.f32.gmra.mxu0 %v313
        %v393 = vpop.f32.mrf.mxu0
        %v394 = vadd.f32 %v306, %v393
        %v395 = vpop.f32.mrf.mxu0
        %v396 = vadd.f32 %v306, %v395
        %397 = vdwg.mxu0
        %398 = vst [vmem:[%s160] sm:$0xff] %v388
        %399 = vst [vmem:[%s160 + $0x8] sm:$0xff] %v390
        %400 = vst [vmem:[%s160 + $0x10] sm:$0xff] %v394
        %401 = vst [vmem:[%s160 + $0x18] sm:$0xff] %v396
        %s402 = sand.u32 %s90, 1
        %s403 = sand.u32 %s90, 1
        %s404 = smul.addr %s403, 32
        %s405 = scalar_lea.vmem [#allocation2], %s404
        // Predicated region
        $region33: #{model_with_flag_forward.1} parent=31 // pred_check
          %p406 = pneg %p100
        $region34: #{model_with_flag_forward.1} parent=31 // pred_check_branch
          %408 = sbr.rel (%p406) target = $region36
        $region35: #{model_with_flag_forward.1} parent=31 // pred_region
          %s409 = smul.u32 2, %s14
          %s410 = smul.addr %s409, 8
          %s411 = scalar_lea.vmem %s3, %s410
          // Predicated region
          $region37: #{model_with_flag_forward.1} parent=35 // pred_check
            _
          $region38: #{model_with_flag_forward.1} parent=35 // pred_check_branch
            %413 = sbr.rel (0) target = $region40
          $region39: #{model_with_flag_forward.1} parent=35 // pred_region
            // Predicated region
            $region41: #{model_with_flag_forward.1} parent=39 // pred_check
              _
            $region42: #{model_with_flag_forward.1} parent=39 // pred_check_branch
              %415 = sbr.rel (0) target = $region44
            $region43: #{model_with_flag_forward.1} parent=39 // pred_region
              loop: start=0, step=1, limit=1
              $region45: #{model_with_flag_forward.1} parent=43 // loop_pre_header
                _
              $region46: #{model_with_flag_forward.1} parent=43 // loop_header
                %s417 = sphi 0, %s421
                %p418 = scmp.ge.s32.totalorder %s417, 1
                %s422 = sphi %s405, %s405
                %s423 = sphi %s411, %s411
              $region47: #{model_with_flag_forward.1} parent=43 // loop_header_branch
                %420 = sbr.rel (%p418) target = $region51
              $region48: #{model_with_flag_forward.1} parent=43 // loop_body
                %v424 = vld [vmem:[%s422] sm:$0xff]
                %425 = vst [vmem:[%s423] sm:$0xff] %v424
                %v426 = vld [vmem:[%s422 + $0x8] sm:$0xff]
                %427 = vst [vmem:[%s423 + $0x8] sm:$0xff] %v426
                %v428 = vld [vmem:[%s422 + $0x10] sm:$0xff]
                %429 = vst [vmem:[%s423 + $0x20] sm:$0xff] %v428
                %v430 = vld [vmem:[%s422 + $0x18] sm:$0xff]
                %431 = vst [vmem:[%s423 + $0x28] sm:$0xff] %v430
              $region49: #{model_with_flag_forward.1} parent=43 // loop_footer
                %s421 = sadd.s32 1, %s417
              $region50: #{model_with_flag_forward.1} parent=43 // loop_footer_branch
                %416 = sbr.rel target = $region46
              $region51: #{model_with_flag_forward.1} parent=43 // loop_exit
                _
            $region44: #{model_with_flag_forward.1} parent=39 // pred_fallthru
              _
            // Predicated region
            $region52: #{model_with_flag_forward.1} parent=39 // pred_check
              _
            $region53: #{model_with_flag_forward.1} parent=39 // pred_check_branch
              %433 = sbr.rel target = $region55
            $region54: #{model_with_flag_forward.1} parent=39 // pred_region
              _
            $region55: #{model_with_flag_forward.1} parent=39 // pred_fallthru
              _
          $region40: #{model_with_flag_forward.1} parent=35 // pred_fallthru
            _
          %434 = vnop
        $region36: #{model_with_flag_forward.1} parent=31 // pred_fallthru
          _
      $region32: #{model_with_flag_forward.1} parent=5 // pred_fallthru
        _
      %p435 = scmp.le.s32.totalorder 2, %s9
      // Predicated region
      $region56: #{model_with_flag_forward.1} parent=5 // pred_check
        %p436 = pneg %p435
      $region57: #{model_with_flag_forward.1} parent=5 // pred_check_branch
        %438 = sbr.rel (%p436) target = $region59
      $region58: #{model_with_flag_forward.1} parent=5 // pred_region
        %s439 = ssub.s32 %s9, 2
        // Predicated region
        $region60: #{model_with_flag_forward.1} parent=58 // pred_check
          %p440 = pneg %p106
        $region61: #{model_with_flag_forward.1} parent=58 // pred_check_branch
          %442 = sbr.rel (%p440) target = $region63
        $region62: #{model_with_flag_forward.1} parent=58 // pred_region
          %s443 = sand.u32 %s91, 1
          %s444 = sand.u32 %s91, 1
          %s445 = smul.addr %s444, 32
          %s446 = scalar_lea.vmem [#allocation2], %s445
        $region63: #{model_with_flag_forward.1} parent=58 // pred_fallthru
          _
      $region59: #{model_with_flag_forward.1} parent=5 // pred_fallthru
        _
    $region6: #{model_with_flag_forward.1} parent=1 // loop_footer
      %s13 = sadd.s32 1, %s9
    $region7: #{model_with_flag_forward.1} parent=1 // loop_footer_branch
      %8 = sbr.rel target = $region3
    $region8: #{model_with_flag_forward.1} parent=1 // loop_exit
      _

</llo_original>
